<compile_context>
chip_gen: v5e
topology: v5e:2x2
jax: 0.10.0
libtpu: 0.0.40
codegen_flags: <defaults>
</compile_context>

<pallas_src>
import functools

import jax
import jax.numpy as jnp
from jax.experimental import pallas as pl
from jax.experimental.pallas import tpu as pltpu

QMIN = -128.0
QMAX = 127.0
EPS = 1.1920929e-07  # torch.finfo(torch.float32).eps

LANES = 128
MAX_TILE_ROWS = 2048            # 2048 * 128 * 4B = 1 MiB per f32 tile buffer
FUSED_MAX_ELEMENTS = 256 * 1024  # 1 MiB f32 slab -> safe single-block fused path


def _cdiv(a, b):
    return -(-a // b)


# ----------------------------- kernels --------------------------------------
def _minmax_kernel(x_ref, min_ref, max_ref):
    """Tiled running min/max. Accumulates an (8,128) partial in the resident
    output blocks (pure VPU elementwise min/max in the hot loop)."""
    i = pl.program_id(0)
    x = x_ref[...].astype(jnp.float32)              # (tile_rows, 128)
    xr = x.reshape(x.shape[0] // 8, 8, x.shape[1])  # sublane-aligned regroup
    tile_min = jnp.min(xr, axis=0)                  # (8, 128), vreg-wise reduce
    tile_max = jnp.max(xr, axis=0)

    @pl.when(i == 0)
    def _():
        min_ref[...] = tile_min
        max_ref[...] = tile_max

    @pl.when(i > 0)
    def _():
        min_ref[...] = jnp.minimum(min_ref[...], tile_min)
        max_ref[...] = jnp.maximum(max_ref[...], tile_max)


def _fake_quant_kernel(x_ref, inv_scale_ref, scale_ref, o_ref):
    """Elementwise fake quant. scale / 1/scale arrive as lane-broadcast
    (1,128) rows (resident across the grid); symmetric -> no zero_point."""
    x = x_ref[...].astype(jnp.float32)
    q = jnp.clip(jnp.round(x * inv_scale_ref[...]), QMIN, QMAX)
    o_ref[...] = (q * scale_ref[...]).astype(o_ref.dtype)


def _fused_obs_fq_kernel(state_ref, x_ref, o_ref, stats_ref):
    """Single-block fused observer + qparams + fake-quant (small tensors).

    state_ref : (2,) f32 SMEM  -- running [min_val, max_val] (may be +/-inf)
    stats_ref : (2,) f32 SMEM  -- batch    [min,      max   ] output
    """
    x = x_ref[...].astype(jnp.float32)
    bmin = jnp.min(x)
    bmax = jnp.max(x)
    stats_ref[0] = bmin
    stats_ref[1] = bmax
    run_min = jnp.minimum(state_ref[0], bmin)
    run_max = jnp.maximum(state_ref[1], bmax)
    amax = jnp.maximum(-jnp.minimum(run_min, 0.0), jnp.maximum(run_max, 0.0))
    scale = jnp.maximum(amax / ((QMAX - QMIN) / 2.0), EPS)
    inv_scale = 1.0 / scale
    q = jnp.clip(jnp.round(x * inv_scale), QMIN, QMAX)
    o_ref[...] = (q * scale).astype(o_ref.dtype)


# ----------------------------- wrappers -------------------------------------
def _as_slab(x, max_tile_rows=MAX_TILE_ROWS):
    """Flatten to a lane-dense (rows, 128) slab with rows % tile_rows == 0.

    Padding (if any) replicates the first element so the observer's min/max
    is unaffected; the padded tail is dropped after the fake-quant pass.
    Returns (slab, n_valid_elements, tile_rows).
    """
    flat = x.reshape(-1)
    total = flat.shape[0]
    rows = _cdiv(total, LANES)
    tile_rows = min(max_tile_rows, _cdiv(rows, 8) * 8)   # multiple of 8
    rows_padded = _cdiv(rows, tile_rows) * tile_rows
    padded_total = rows_padded * LANES
    if padded_total != total:
        pad = jnp.full((padded_total - total,), flat[0], dtype=flat.dtype)
        flat = jnp.concatenate([flat, pad])
    return flat.reshape(rows_padded, LANES), total, tile_rows


def _observe_minmax(x2d, tile_rows):
    rows, lanes = x2d.shape
    num_tiles = rows // tile_rows
    mn, mx = pl.pallas_call(
        _minmax_kernel,
        out_shape=(
            jax.ShapeDtypeStruct((8, lanes), jnp.float32),
            jax.ShapeDtypeStruct((8, lanes), jnp.float32),
        ),
        grid=(num_tiles,),
        in_specs=[pl.BlockSpec((tile_rows, lanes), lambda i: (i, 0))],
        out_specs=(
            pl.BlockSpec((8, lanes), lambda i: (0, 0)),
            pl.BlockSpec((8, lanes), lambda i: (0, 0)),
        ),
        compiler_params=pltpu.CompilerParams(
            dimension_semantics=("arbitrary",)   # carried accumulation
        ),
    )(x2d)
    # final cross-lane reduce of the tiny (8,128) partials done in XLA
    return jnp.min(mn), jnp.max(mx)


def _apply_fake_quant(x2d, scale, tile_rows):
    rows, lanes = x2d.shape
    num_tiles = rows // tile_rows
    scale = scale.astype(jnp.float32)
    inv_scale = (1.0 / scale).astype(jnp.float32)
    scale_row = jnp.full((1, lanes), scale, jnp.float32)
    inv_row = jnp.full((1, lanes), inv_scale, jnp.float32)
    return pl.pallas_call(
        _fake_quant_kernel,
        out_shape=jax.ShapeDtypeStruct(x2d.shape, x2d.dtype),
        grid=(num_tiles,),
        in_specs=[
            pl.BlockSpec((tile_rows, lanes), lambda i: (i, 0)),
            pl.BlockSpec((1, lanes), lambda i: (0, 0)),
            pl.BlockSpec((1, lanes), lambda i: (0, 0)),
        ],
        out_specs=pl.BlockSpec((tile_rows, lanes), lambda i: (i, 0)),
        compiler_params=pltpu.CompilerParams(
            dimension_semantics=("parallel",)    # megacore-friendly
        ),
    )(x2d, inv_row, scale_row)


def _fused_forward(x2d, run_min, run_max):
    state = jnp.stack([run_min, run_max]).astype(jnp.float32)
    y2d, stats = pl.pallas_call(
        _fused_obs_fq_kernel,
        out_shape=(
            jax.ShapeDtypeStruct(x2d.shape, x2d.dtype),
            jax.ShapeDtypeStruct((2,), jnp.float32),
        ),
        in_specs=[
            pl.BlockSpec(memory_space=pltpu.MemorySpace.SMEM),
            pl.BlockSpec(memory_space=pltpu.MemorySpace.VMEM),
        ],
        out_specs=(
            pl.BlockSpec(memory_space=pltpu.MemorySpace.VMEM),
            pl.BlockSpec(memory_space=pltpu.MemorySpace.SMEM),
        ),
    )(state, x2d)
    return y2d, stats[0], stats[1]


# ----------------------------- module ---------------------------------------
class FakeQuantizePerTensorSymmetric:
    """Concrete FakeQuantizeBase: per-tensor symmetric qint8 fake quant."""

    @classmethod
    def with_args(cls, *args, **kwargs):
        return functools.partial(cls, *args, **kwargs)

    def __init__(self, observer_enabled=True, fake_quant_enabled=True,
                 fused_max_elements=FUSED_MAX_ELEMENTS):
        self.observer_enabled = observer_enabled
        self.fake_quant_enabled = fake_quant_enabled
        self.fused_max_elements = fused_max_elements
        # running observer state (torch MinMaxObserver-style +/-inf init)
        self.min_val = jnp.array(jnp.inf, jnp.float32)
        self.max_val = jnp.array(-jnp.inf, jnp.float32)

    def enable_observer(self):
        self.observer_enabled = True

    def disable_observer(self):
        self.observer_enabled = False

    def enable_fake_quant(self):
        self.fake_quant_enabled = True

    def disable_fake_quant(self):
        self.fake_quant_enabled = False

    def calculate_qparams(self):
        min_v = jnp.minimum(self.min_val, 0.0)
        max_v = jnp.maximum(self.max_val, 0.0)
        amax = jnp.maximum(-min_v, max_v)
        scale = jnp.maximum(amax / ((QMAX - QMIN) / 2.0), EPS)
        zero_point = jnp.zeros((), jnp.int32)     # symmetric -> zp == 0
        return scale.astype(jnp.float32), zero_point

    def forward(self, x):
        orig_shape = x.shape
        x2d, total, tile_rows = _as_slab(x)

        # Fused single-pass path: one HBM read + one write when everything
        # fits in VMEM and both stages are enabled.
        if (self.observer_enabled and self.fake_quant_enabled
                and x2d.size <= self.fused_max_elements):
            y2d, bmin, bmax = _fused_forward(x2d, self.min_val, self.max_val)
            self.min_val = jnp.minimum(self.min_val, bmin)
            self.max_val = jnp.maximum(self.max_val, bmax)
            return y2d.reshape(-1)[:total].reshape(orig_shape)

        if self.observer_enabled:
            batch_min, batch_max = _observe_minmax(x2d, tile_rows)
            self.min_val = jnp.minimum(self.min_val, batch_min)
            self.max_val = jnp.maximum(self.max_val, batch_max)

        if not self.fake_quant_enabled:
            return x

        scale, _zp = self.calculate_qparams()     # zp == 0, kept out of hot path
        y2d = _apply_fake_quant(x2d, scale, tile_rows)
        return y2d.reshape(-1)[:total].reshape(orig_shape)

    __call__ = forward


# ----------------------------- reference ------------------------------------
def _reference(x):
    min_v = jnp.minimum(jnp.min(x), 0.0)
    max_v = jnp.maximum(jnp.max(x), 0.0)
    amax = jnp.maximum(-min_v, max_v)
    scale = jnp.maximum(amax / ((QMAX - QMIN) / 2.0), EPS)
    inv_scale = 1.0 / scale
    q = jnp.clip(jnp.round(x * inv_scale), QMIN, QMAX)
    return q * scale


if __name__ == "__main__":
    key = jax.random.PRNGKey(0)
    x = jax.random.normal(key, (2, 4, 16, 16), dtype=jnp.float32)
    y_ref = _reference(x)

    # 1) fused single-block path (observer + fake-quant, small tensor)
    fq = FakeQuantizePerTensorSymmetric(observer_enabled=True,
                                        fake_quant_enabled=True)
    y = fq(x)
    jax.block_until_ready(y)
    assert y.shape == x.shape and y.dtype == x.dtype
    err = float(jnp.max(jnp.abs(y - y_ref)))
    assert err <= 1e-5, f"max abs err (fused path) {err}"

    # 2) tiled two-pass path (forced by disabling fusion)
    fq_tiled = FakeQuantizePerTensorSymmetric(fused_max_elements=0)
    y_t = fq_tiled(x)
    jax.block_until_ready(y_t)
    err_t = float(jnp.max(jnp.abs(y_t - y_ref)))
    assert err_t <= 1e-5, f"max abs err (tiled path) {err_t}"

    # 3) non-divisible element count exercises the padding / remainder path
    x_odd = jax.random.normal(jax.random.PRNGKey(0), (3, 5, 7, 11),
                              dtype=jnp.float32)
    fq_odd = FakeQuantizePerTensorSymmetric()
    y_odd = fq_odd(x_odd)
    jax.block_until_ready(y_odd)
    err_odd = float(jnp.max(jnp.abs(y_odd - _reference(x_odd))))
    assert y_odd.shape == x_odd.shape
    assert err_odd <= 1e-5, f"max abs err (padded path) {err_odd}"

    # 4) fake_quant disabled path: observer (tiled) still runs, input returned
    fq.disable_fake_quant()
    y_id = fq(x)
    jax.block_until_ready(y_id)
    assert bool(jnp.array_equal(y_id, x))

    print("KERNEL_OK")
</pallas_src>

<mosaic_0001>
module attributes {stable_mosaic.version = 11 : i64} {
  func.func @_fused_obs_fq_kernel(%arg0: memref<2xf32, #tpu.memory_space<smem>>, %arg1: memref<16x128xf32, #tpu.memory_space<vmem>>, %arg2: memref<16x128xf32, #tpu.memory_space<vmem>>, %arg3: memref<2xf32, #tpu.memory_space<smem>>) attributes {dimension_semantics = [], scalar_prefetch = 0 : i64, scratch_operands = 0 : i64, tpu.core_type = #tpu.core_type<tc>} {
    %c0 = arith.constant 0 : index
    %c0_0 = arith.constant 0 : index
    %0 = vector.load %arg1[%c0, %c0_0] : memref<16x128xf32, #tpu.memory_space<vmem>>, vector<16x128xf32>
    %1 = vector.shape_cast %0 : vector<16x128xf32> to vector<1x16x128xf32>
    %cst = arith.constant dense<0x7F800000> : vector<1xf32>
    %2 = vector.multi_reduction <minimumf>, %1, %cst [1, 2] : vector<1x16x128xf32> to vector<1xf32>
    %3 = vector.shape_cast %2 : vector<1xf32> to vector<1x1x1xf32>
    %4 = vector.extract %3[0, 0, 0] : f32 from vector<1x1x1xf32>
    %5 = vector.shape_cast %0 : vector<16x128xf32> to vector<1x16x128xf32>
    %cst_1 = arith.constant dense<0xFF800000> : vector<1xf32>
    %6 = vector.multi_reduction <maximumf>, %5, %cst_1 [1, 2] : vector<1x16x128xf32> to vector<1xf32>
    %7 = vector.shape_cast %6 : vector<1xf32> to vector<1x1x1xf32>
    %8 = vector.extract %7[0, 0, 0] : f32 from vector<1x1x1xf32>
    %c0_2 = arith.constant 0 : index
    %9 = memref.load %arg3[%c0_2] : memref<2xf32, #tpu.memory_space<smem>>
    memref.store %4, %arg3[%c0_2] : memref<2xf32, #tpu.memory_space<smem>>
    %c1 = arith.constant 1 : index
    %10 = memref.load %arg3[%c1] : memref<2xf32, #tpu.memory_space<smem>>
    memref.store %8, %arg3[%c1] : memref<2xf32, #tpu.memory_space<smem>>
    %c0_3 = arith.constant 0 : index
    %11 = memref.load %arg0[%c0_3] : memref<2xf32, #tpu.memory_space<smem>>
    %12 = arith.minimumf %11, %4 : f32
    %c1_4 = arith.constant 1 : index
    %13 = memref.load %arg0[%c1_4] : memref<2xf32, #tpu.memory_space<smem>>
    %14 = arith.maximumf %13, %8 : f32
    %cst_5 = arith.constant 0.000000e+00 : f32
    %15 = arith.minimumf %12, %cst_5 : f32
    %cst_6 = arith.constant 0.000000e+00 : f32
    %16 = arith.subf %cst_6, %15 : f32
    %cst_7 = arith.constant 0.000000e+00 : f32
    %17 = arith.maximumf %14, %cst_7 : f32
    %18 = arith.maximumf %16, %17 : f32
    %cst_8 = arith.constant 1.275000e+02 : f32
    %19 = arith.divf %18, %cst_8 : f32
    %cst_9 = arith.constant 1.1920929E-7 : f32
    %20 = arith.maximumf %19, %cst_9 : f32
    %cst_10 = arith.constant 1.000000e+00 : f32
    %21 = arith.divf %cst_10, %20 : f32
    %22 = vector.broadcast %21 : f32 to vector<16x128xf32>
    %23 = arith.mulf %0, %22 : vector<16x128xf32>
    %24 = math.roundeven %23 : vector<16x128xf32>
    %cst_11 = arith.constant -1.280000e+02 : f32
    %cst_12 = arith.constant 1.270000e+02 : f32
    %25 = vector.broadcast %cst_11 : f32 to vector<16x128xf32>
    %26 = arith.maximumf %25, %24 : vector<16x128xf32>
    %27 = vector.broadcast %cst_12 : f32 to vector<16x128xf32>
    %28 = arith.minimumf %27, %26 : vector<16x128xf32>
    %29 = vector.broadcast %20 : f32 to vector<16x128xf32>
    %30 = arith.mulf %28, %29 : vector<16x128xf32>
    %c0_13 = arith.constant 0 : index
    %c0_14 = arith.constant 0 : index
    %31 = vector.load %arg2[%c0_13, %c0_14] : memref<16x128xf32, #tpu.memory_space<vmem>>, vector<16x128xf32>
    tpu.vector_store %arg2[%c0_13, %c0_14], %30 {strides = array<i32>} : memref<16x128xf32, #tpu.memory_space<vmem>>, vector<16x128xf32>,
    return
  }
}

</mosaic_0001>

<llo_original>
// kernel: tpu_custom_call.1
$region0: #{tpu_custom_call.1}
  #allocation0 [shape = 'u32[]', space=smem, size = 0x4, offset = 0x4, fixed_abs, tag = 'smem constant byte address 0x4 - core index']
  #allocation1 [shape = 'u32[72,128]{1,0:T(1,128)}', space=vmem, size = 0x9000, scoped, tag = 'internal scratch']
  %s0 = inlined_call_operand.hbm [shape: f32[2], index: 0, kind: input, shape index: {}]
  %s1 = inlined_call_operand.hbm [shape: f32[16,128], index: 1, kind: input, shape index: {}]
  %s2 = inlined_call_operand.hbm [shape: f32[16,128], index: 2, kind: output, shape index: {0}]
  %s3 = inlined_call_operand.hbm [shape: f32[2], index: 3, kind: output, shape index: {1}]
  %4 = xla_tuple %s2, %s3
  %s5 = sld [smem:[#allocation0]]
  $region34: #{tpu_custom_call.1} parent=0
    _
  %s7 = ssub.s32 1, %s5
  %s8 = scalar_select 0, %s7, %s5
  $region1: #{tpu_custom_call.1} parent=0
    #allocation2 [shape = 'u8[512]{0}', space=smem, size = 0x200, scoped, tag = 'input window, operand 0, single buffered']
    #allocation3 [shape = 's32[1]{0}', space=sflag, size = 0x4, scoped, tag = 'scoped memory for tpu_custom_call.1']
    #allocation4 [shape = 's32[1]{0}', space=sflag, size = 0x4, scoped, tag = 'scoped memory for tpu_custom_call.1']
    #allocation5 [shape = 's32[1]{0}', space=sflag, size = 0x4, scoped, tag = 'scoped memory for tpu_custom_call.1']
    #allocation6 [shape = 's32[1]{0}', space=sflag, size = 0x4, scoped, tag = 'scoped memory for tpu_custom_call.1']
    #allocation7 [shape = 'u8[8192]{0}', space=vmem, size = 0x2000, scoped, tag = 'input window, operand 1, single buffered']
    #allocation8 [shape = 'u8[8192]{0}', space=vmem, size = 0x2000, scoped, tag = 'output window, operand 0, single buffered']
    #allocation9 [shape = 'u8[512]{0}', space=smem, size = 0x200, scoped, tag = 'output window, operand 1, single buffered']
    %9 = vsyncpa [#allocation5], 0
    %10 = vsyncpa [#allocation3], 0
    %11 = vsyncpa [#allocation4], 0
    %12 = vsyncpa [#allocation6], 0
    // Predicated region
    $region2: #{tpu_custom_call.1} parent=1 // pred_check
      _
    $region3: #{tpu_custom_call.1} parent=1 // pred_check_branch
      %14 = sbr.rel (0) target = $region5
    $region4: #{tpu_custom_call.1} parent=1 // pred_region
      %16 = vsyncadd [#allocation5], 0
      %s18 = sshll.u32 %s0, 4
      %s19 = int_to_ptr.hbm [resolvable:$true] %s18
      %21 = dma.hbm_to_smem %s19, 16, [#allocation2], [#allocation5]
    $region5: #{tpu_custom_call.1} parent=1 // pred_fallthru
      _
    // Predicated region
    $region6: #{tpu_custom_call.1} parent=1 // pred_check
      _
    $region7: #{tpu_custom_call.1} parent=1 // pred_check_branch
      %23 = sbr.rel (0) target = $region9
    $region8: #{tpu_custom_call.1} parent=1 // pred_region
      %25 = vsyncadd [#allocation3], 0
      %s26 = sshll.u32 %s1, 4
      %s27 = int_to_ptr.hbm [resolvable:$true] %s26
      %s28 = sshll.u32 [#allocation7], 4
      %s29 = int_to_ptr.vmem [resolvable:$true] %s28
      %34 = dma.hbm_to_vmem [thread:$0]  %s27, 256, %s29, [#allocation3], 128, 128, 8
    $region9: #{tpu_custom_call.1} parent=1 // pred_fallthru
      _
    // Predicated region
    $region10: #{tpu_custom_call.1} parent=1 // pred_check
      _
    $region11: #{tpu_custom_call.1} parent=1 // pred_check_branch
      %36 = sbr.rel (0) target = $region13
    $region12: #{tpu_custom_call.1} parent=1 // pred_region
      %38 = dma.done [#allocation5], 16
    $region13: #{tpu_custom_call.1} parent=1 // pred_fallthru
      _
    // Predicated region
    $region14: #{tpu_custom_call.1} parent=1 // pred_check
      _
    $region15: #{tpu_custom_call.1} parent=1 // pred_check_branch
      %40 = sbr.rel (0) target = $region17
    $region16: #{tpu_custom_call.1} parent=1 // pred_region
      %42 = dma.done [#allocation3], 256
    $region17: #{tpu_custom_call.1} parent=1 // pred_fallthru
      _
    %43 = sfence
    %v44 = vld [vmem:[#allocation7] sm:$0xff]
    %v45 = vld [vmem:[#allocation7 + $0x8] sm:$0xff]
    %v46 = vmin.f32 %v44, %v45
    %47 = vmin.xlane.f32.xlu0 %v46
    %v48 = vpop.xlane.xlu0 %47
    %v49 = vrot.slane %v48, 4
    %v50 = vmin.f32 %v48, %v49
    %v51 = vrot.slane %v50, 2
    %v52 = vmin.f32 %v50, %v51
    %v53 = vrot.slane %v52, 1
    %v54 = vmin.f32 %v52, %v53
    %s55 = vtos %v54
    %v56 = vmax.f32 %v44, %v45
    %57 = vmax.xlane.f32.xlu0 %v56
    %v58 = vpop.xlane.xlu0 %57
    %v59 = vrot.slane %v58, 4
    %v60 = vmax.f32 %v58, %v59
    %v61 = vrot.slane %v60, 2
    %v62 = vmax.f32 %v60, %v61
    %v63 = vrot.slane %v62, 1
    %v64 = vmax.f32 %v62, %v63
    %s65 = vtos %v64
    %s66 = scalar_lea.smem [#allocation9], 0
    %67 = sst [smem:[%s66]] %s55
    %s68 = scalar_lea.smem [#allocation9], 1
    %69 = sst [smem:[%s68]] %s65
    %s70 = sld [smem:[#allocation2]]
    %s71 = smin.f32 %s70, %s55
    %s72 = sld [smem:[#allocation2 + $0x1]]
    %s73 = smax.f32 %s72, %s65
    %s74 = smin.f32 %s71, 0.0
    %s75 = ssub.f32 0.0, %s74
    %s76 = smax.f32 %s73, 0.0
    %s77 = smax.f32 %s75, %s76
    %v78 = vrcp.pop 127.5
    %v79 = vmul.f32 127.5, %v78
    %v80 = vsub.f32 1.0, %v79
    %v81 = vmul.f32 %v78, %v80
    %v82 = vadd.f32 %v78, %v81
    %vm83 = vweird.f32 %v78
    %v84 = vsel %vm83, %v78, %v82
    %s85 = vtos %v84
    %s86 = smul.f32 %s77, %s85
    %s87 = smax.f32 %s86, 1.1920929e-07
    %v88 = vstv %s87
    %v89 = vrcp.pop %v88
    %v90 = vmul.f32 %v88, %v89
    %v91 = vsub.f32 1.0, %v90
    %v92 = vmul.f32 %v89, %v91
    %v93 = vadd.f32 %v89, %v92
    %vm94 = vweird.f32 %v88
    %vm95 = vweird.f32 %v89
    %vm96 = vmor %vm94, %vm95
    %v97 = vsel %vm96, %v89, %v93
    %v98 = vand.u32 2147483647, %v88
    %vm99 = vcmp.eq.f32.partialorder %v98, 8.507059e+37
    %v100 = vand.u32 %v88, 2147483648
    %v101 = vor.u32 1.1754944e-38, %v100
    %v102 = vsel %vm99, %v101, %v97
    %s103 = vtos %v102
    %v104 = vstv %s103
    %v105 = vmul.f32 %v44, %v104
    %v106 = vmul.f32 %v45, %v104
    %v107 = vround.ne.pseudo %v105
    %v108 = vround.ne.pseudo %v106
    %v109 = vmax.f32 %v107, -128.0
    %v110 = vmax.f32 %v108, -128.0
    %v111 = vmin.f32 %v109, 127.0
    %v112 = vmin.f32 %v110, 127.0
    %v113 = vstv %s87
    %v114 = vmul.f32 %v111, %v113
    %v115 = vmul.f32 %v112, %v113
    %116 = vst [vmem:[#allocation8] sm:$0xff] %v114
    %117 = vst [vmem:[#allocation8 + $0x8] sm:$0xff] %v115
    // Predicated region
    $region18: #{tpu_custom_call.1} parent=1 // pred_check
      _
    $region19: #{tpu_custom_call.1} parent=1 // pred_check_branch
      %119 = sbr.rel (0) target = $region21
    $region20: #{tpu_custom_call.1} parent=1 // pred_region
      %121 = vsyncadd [#allocation4], 0
      %s122 = sshll.u32 [#allocation8], 4
      %s123 = int_to_ptr.vmem [resolvable:$true] %s122
      %s124 = sshll.u32 %s2, 4
      %s125 = int_to_ptr.hbm [resolvable:$true] %s124
      %130 = dma.vmem_to_hbm [thread:$0]  %s123, 256, %s125, [#allocation4], 128, 128, 8
    $region21: #{tpu_custom_call.1} parent=1 // pred_fallthru
      _
    // Predicated region
    $region22: #{tpu_custom_call.1} parent=1 // pred_check
      _
    $region23: #{tpu_custom_call.1} parent=1 // pred_check_branch
      %132 = sbr.rel (0) target = $region25
    $region24: #{tpu_custom_call.1} parent=1 // pred_region
      %134 = vsyncadd [#allocation6], 0
      %s136 = sshll.u32 %s3, 4
      %s137 = int_to_ptr.hbm [resolvable:$true] %s136
      %139 = dma.smem_to_hbm [#allocation9], 16, %s137, [#allocation6]
    $region25: #{tpu_custom_call.1} parent=1 // pred_fallthru
      _
    // Predicated region
    $region26: #{tpu_custom_call.1} parent=1 // pred_check
      _
    $region27: #{tpu_custom_call.1} parent=1 // pred_check_branch
      %141 = sbr.rel (0) target = $region29
    $region28: #{tpu_custom_call.1} parent=1 // pred_region
      %143 = dma.done [#allocation4], 256
    $region29: #{tpu_custom_call.1} parent=1 // pred_fallthru
      _
    // Predicated region
    $region30: #{tpu_custom_call.1} parent=1 // pred_check
      _
    $region31: #{tpu_custom_call.1} parent=1 // pred_check_branch
      %145 = sbr.rel (0) target = $region33
    $region32: #{tpu_custom_call.1} parent=1 // pred_region
      %147 = dma.done [#allocation6], 16
    $region33: #{tpu_custom_call.1} parent=1 // pred_fallthru
      _
    %148 = sfence
    %149 = vsyncpa [#allocation3], 1
    %150 = vsyncpa [#allocation4], 1
    %151 = vsyncpa [#allocation5], 1
    %152 = vsyncpa [#allocation6], 1

</llo_original>
